<compile_context>
chip_gen: v7x
topology: tpu7x:2x2x1
jax: 0.10.0
libtpu: 0.0.40
codegen_flags: <defaults>
</compile_context>

<pallas_src>
import numpy as np
import jax
import jax.numpy as jnp
from jax.experimental import pallas as pl
from jax.experimental.pallas import tpu as pltpu


OUT_DIM = 13 + 9 + 9 + 15 + 15 + 3   # 64 = trunk|larm|rarm|lleg|rleg|root
OUT_PAD = 128                        # lane-dense padded output width
TM = 8                               # batch tile (rows per grid step)

# final-concat column layout (matches torch.cat order in the reference module)
_COLS_TRUNK = slice(0, 13)
_COLS_LARM  = slice(13, 22)
_COLS_RARM  = slice(22, 31)
_COLS_LLEG  = slice(31, 46)
_COLS_RLEG  = slice(46, 61)
_COLS_ROOT  = slice(61, 64)
# torso head has 16 outputs: first 13 -> trunk slot, last 3 -> root slot
_TORSO_COLS = np.concatenate([np.arange(0, 13), np.arange(61, 64)])


# ----------------------------------------------------------------------------
# Kernel: whole decoder = two MXU dots (row-split fused weight) + bias.
# ----------------------------------------------------------------------------
def vel_decoder_kernel(xu_ref, xl_ref, wu_ref, wl_ref, b_ref, out_ref):
    f32 = jnp.float32
    acc = jnp.dot(xu_ref[...], wu_ref[...], preferred_element_type=f32)
    acc = acc + jnp.dot(xl_ref[...], wl_ref[...], preferred_element_type=f32)
    out_ref[...] = (acc + b_ref[...]).astype(out_ref.dtype)


# ----------------------------------------------------------------------------
# Wrapper.  Returns the 128-lane padded buffer (lane-dense store, no extra
# XLA copy); the semantic [B, 64] prediction is just `out[..., :OUT_DIM]`,
# which the consumer can slice lazily (see vel_decoder_pred / __main__).
# ----------------------------------------------------------------------------
def vel_decoder_cell(h_upper, h_lower, fused_params):
    """fused_params = (w_up, w_low, b_total) from fuse_params()."""
    w_up, w_low, b_tot = fused_params
    B, h3 = h_upper.shape
    grid = (pl.cdiv(B, TM),)
    return pl.pallas_call(
        vel_decoder_kernel,
        out_shape=jax.ShapeDtypeStruct((B, OUT_PAD), h_upper.dtype),
        grid=grid,
        in_specs=[
            pl.BlockSpec((TM, h3), lambda i: (i, 0)),        # h_upper tile
            pl.BlockSpec((TM, h3), lambda i: (i, 0)),        # h_lower tile
            pl.BlockSpec((h3, OUT_PAD), lambda i: (0, 0)),   # W_up  (resident)
            pl.BlockSpec((h3, OUT_PAD), lambda i: (0, 0)),   # W_low (resident)
            pl.BlockSpec((1, OUT_PAD), lambda i: (0, 0)),    # bias  (resident)
        ],
        out_specs=pl.BlockSpec((TM, OUT_PAD), lambda i: (i, 0)),
        compiler_params=pltpu.CompilerParams(
            dimension_semantics=("parallel",)),              # v7x: shard over 2 TCs
    )(h_upper, h_lower, w_up, w_low, b_tot)


def vel_decoder_pred(h_upper, h_lower, fused_params):
    """Semantic output matching the PyTorch forward: [B, 64]."""
    return vel_decoder_cell(h_upper, h_lower, fused_params)[..., :OUT_DIM]


# ----------------------------------------------------------------------------
# One-time weight fusion (pure bookkeeping, done outside the per-call path).
# Collapses the full affine tree into W_total [2*h3, 128] / b_total [1, 128],
# then row-splits W_total so the kernel never needs a concat of the inputs.
# ----------------------------------------------------------------------------
def _block_diag(*mats):
    rows = sum(m.shape[0] for m in mats)
    cols = sum(m.shape[1] for m in mats)
    out = jnp.zeros((rows, cols), mats[0].dtype)
    r = c = 0
    for m in mats:
        out = out.at[r:r + m.shape[0], c:c + m.shape[1]].set(m)
        r += m.shape[0]
        c += m.shape[1]
    return out


def fuse_params(params, h1, h2, h3, weight_dtype=jnp.float32):
    (w3a, b3a, w3l, b3l,
     w2ra, b2ra, w2la, b2la, w2rl, b2rl, w2ll, b2ll,
     w1ra, b1ra, w1la, b1la, w1rl, b1rl, w1ll, b1ll, w1t, b1t) = params
    f32 = jnp.float32

    # layer 3: [h_upper | h_lower] -> [upper(2*h2) | lower(2*h2)]
    w3f = _block_diag(w3a, w3l)
    b3f = jnp.concatenate([b3a, b3l], axis=-1)

    # layer 2: act3 -> [ra2 | la2 | rl2 | ll2] (each 2*h1 wide)
    w2f = _block_diag(w2ra, w2la, w2rl, w2ll)
    b2f = jnp.concatenate([b2ra, b2la, b2rl, b2ll], axis=-1)

    # layer 1: act2 (8 segments of h1) -> padded, concat-ordered output.
    # Torso average folded into the weights:
    #   (t1+t2+t3+t4)/4 = sum_i seg_i @ (w1t/4) + b1t
    w1f = jnp.zeros((8 * h1, OUT_PAD), f32)
    b1f = jnp.zeros((1, OUT_PAD), f32)
    wt_q = 0.25 * w1t

    def rows(i):
        return slice(i * h1, (i + 1) * h1)

    # limb heads act on the first half of each layer-2 output
    w1f = w1f.at[rows(0), _COLS_RARM].set(w1ra)   # ra2[:, :h1]
    w1f = w1f.at[rows(2), _COLS_LARM].set(w1la)   # la2[:, :h1]
    w1f = w1f.at[rows(4), _COLS_RLEG].set(w1rl)   # rl2[:, :h1]
    w1f = w1f.at[rows(6), _COLS_LLEG].set(w1ll)   # ll2[:, :h1]
    # shared torso head acts on the second half of each layer-2 output
    for i in (1, 3, 5, 7):
        w1f = w1f.at[rows(i), _TORSO_COLS].set(wt_q)

    b1f = b1f.at[0, _COLS_RARM].set(b1ra[0])
    b1f = b1f.at[0, _COLS_LARM].set(b1la[0])
    b1f = b1f.at[0, _COLS_RLEG].set(b1rl[0])
    b1f = b1f.at[0, _COLS_LLEG].set(b1ll[0])
    b1f = b1f.at[0, _TORSO_COLS].set(b1t[0])      # (b+b+b+b)/4 = b

    # Full collapse (valid because the module has no nonlinearities):
    w_total = w3f @ w2f @ w1f                                  # [2*h3, 128]
    b_total = ((b3f @ w2f) + b2f) @ w1f + b1f                  # [1, 128]

    # Row-split so the kernel takes h_upper / h_lower separately (no concat).
    w_up = w_total[:h3, :].astype(weight_dtype)
    w_low = w_total[h3:, :].astype(weight_dtype)
    # NOTE(v5e): pass weight_dtype=jnp.bfloat16 to halve weight DMA bytes;
    # keep preferred_element_type=f32 in the kernel and loosen test tolerance.
    return w_up, w_low, b_total.astype(jnp.float32)


# ----------------------------------------------------------------------------
# Deterministic parameter init (PyTorch nn.Linear-style uniform bounds)
# ----------------------------------------------------------------------------
def init_linear(key, in_dim, out_dim):
    kw, kb = jax.random.split(key)
    bound = 1.0 / float(in_dim) ** 0.5
    w = jax.random.uniform(kw, (in_dim, out_dim), jnp.float32, -bound, bound)
    b = jax.random.uniform(kb, (1, out_dim), jnp.float32, -bound, bound)
    return w, b


def make_params(key, h1, h2, h3):
    keys = jax.random.split(key, 11)
    layer_dims = [
        (h3, 2 * h2),  # layer3_arm_dec
        (h3, 2 * h2),  # layer3_leg_dec
        (h2, 2 * h1),  # layer2_rarm_dec
        (h2, 2 * h1),  # layer2_larm_dec
        (h2, 2 * h1),  # layer2_rleg_dec
        (h2, 2 * h1),  # layer2_lleg_dec
        (h1, 9),       # layer1_rarm_dec
        (h1, 9),       # layer1_larm_dec
        (h1, 15),      # layer1_rleg_dec
        (h1, 15),      # layer1_lleg_dec
        (h1, 16),      # layer1_torso_dec
    ]
    flat = []
    for k, (din, dout) in zip(keys, layer_dims):
        w, b = init_linear(k, din, dout)
        flat += [w, b]
    return tuple(flat)


# ----------------------------------------------------------------------------
# Pure-JAX reference (mirrors the PyTorch forward exactly, unfused weights)
# ----------------------------------------------------------------------------
def vel_decoder_ref(h_upper, h_lower, params):
    (w3a, b3a, w3l, b3l,
     w2ra, b2ra, w2la, b2la, w2rl, b2rl, w2ll, b2ll,
     w1ra, b1ra, w1la, b1la, w1rl, b1rl, w1ll, b1ll, w1t, b1t) = params
    lin = lambda x, w, b: x @ w + b
    h2 = w2ra.shape[0]
    h1 = w1ra.shape[0]
    upper = lin(h_upper, w3a, b3a)
    lower = lin(h_lower, w3l, b3l)
    ra2 = lin(upper[..., :h2], w2ra, b2ra)
    la2 = lin(upper[..., -h2:], w2la, b2la)
    rl2 = lin(lower[..., :h2], w2rl, b2rl)
    ll2 = lin(lower[..., -h2:], w2ll, b2ll)
    ra1 = lin(ra2[..., :h1], w1ra, b1ra)
    t1 = lin(ra2[..., -h1:], w1t, b1t)
    la1 = lin(la2[..., :h1], w1la, b1la)
    t2 = lin(la2[..., -h1:], w1t, b1t)
    rl1 = lin(rl2[..., :h1], w1rl, b1rl)
    t3 = lin(rl2[..., -h1:], w1t, b1t)
    ll1 = lin(ll2[..., :h1], w1ll, b1ll)
    t4 = lin(ll2[..., -h1:], w1t, b1t)
    torso = (t1 + t2 + t3 + t4) / 4.0
    return jnp.concatenate(
        [torso[..., :13], la1, ra1, ll1, rl1, torso[..., -3:]], axis=-1)


# ----------------------------------------------------------------------------
if __name__ == "__main__":
    h1, h2, h3 = 32, 32, 32
    batch = 16                       # 2 batch tiles -> exercises the parallel grid

    key = jax.random.PRNGKey(0)
    k_up, k_low, k_params = jax.random.split(key, 3)
    h_upper = jax.random.normal(k_up, (batch, h3), jnp.float32)
    h_lower = jax.random.normal(k_low, (batch, h3), jnp.float32)

    params = make_params(k_params, h1, h2, h3)
    fused = fuse_params(params, h1, h2, h3)      # one-time weight bookkeeping

    out_pad = vel_decoder_cell(h_upper, h_lower, fused)
    out_pad = jax.block_until_ready(out_pad)
    assert out_pad.shape == (batch, OUT_PAD), out_pad.shape

    pred = out_pad[..., :OUT_DIM]                # lazy consumer-side slice
    ref = vel_decoder_ref(h_upper, h_lower, params)
    assert pred.shape == (batch, OUT_DIM), pred.shape
    # single-matmul collapse reassociates fp sums (block-diag, torso fold,
    # W3@W2@W1 precontraction) -> tiny f32 diffs
    assert jnp.allclose(pred, ref, atol=1e-4, rtol=1e-4), \
        float(jnp.max(jnp.abs(pred - ref)))
    # padded lanes must stay zero-contribution-free of garbage? they are b=0 + 0-weights
    assert jnp.allclose(out_pad[..., OUT_DIM:], 0.0, atol=1e-6)

    print("KERNEL_OK")
</pallas_src>

<mosaic_0001>
module attributes {stable_mosaic.version = 11 : i64} {
  func.func @vel_decoder_kernel(%arg0: i32, %arg1: memref<8x32xf32, #tpu.memory_space<vmem>>, %arg2: memref<8x32xf32, #tpu.memory_space<vmem>>, %arg3: memref<32x128xf32, #tpu.memory_space<vmem>>, %arg4: memref<32x128xf32, #tpu.memory_space<vmem>>, %arg5: memref<1x128xf32, #tpu.memory_space<vmem>>, %arg6: memref<8x128xf32, #tpu.memory_space<vmem>>) attributes {dimension_semantics = [#tpu.dimension_semantics<parallel>], iteration_bounds = array<i64: 2>, scalar_prefetch = 0 : i64, scratch_operands = 0 : i64, tpu.core_type = #tpu.core_type<tc>, window_params = [{transform_indices = @transform_0, window_bounds = array<i64: 8, 32>}, {transform_indices = @transform_1, window_bounds = array<i64: 8, 32>}, {pipeline_mode = #tpu.pipeline_mode<synchronous>, transform_indices = @transform_2, window_bounds = array<i64: 32, 128>}, {pipeline_mode = #tpu.pipeline_mode<synchronous>, transform_indices = @transform_3, window_bounds = array<i64: 32, 128>}, {pipeline_mode = #tpu.pipeline_mode<synchronous>, transform_indices = @transform_4, window_bounds = array<i64: 1, 128>}, {transform_indices = @transform_5, window_bounds = array<i64: 8, 128>}]} {
    %c0 = arith.constant 0 : index
    %c0_0 = arith.constant 0 : index
    %0 = vector.load %arg1[%c0, %c0_0] : memref<8x32xf32, #tpu.memory_space<vmem>>, vector<8x32xf32>
    %c0_1 = arith.constant 0 : index
    %c0_2 = arith.constant 0 : index
    %1 = vector.load %arg3[%c0_1, %c0_2] : memref<32x128xf32, #tpu.memory_space<vmem>>, vector<32x128xf32>
    %cst = arith.constant dense<0.000000e+00> : vector<8x128xf32>
    %2 = tpu.matmul %0, %1, %cst {dimension_numbers = #tpu.dot_dimension_numbers<[1], [0], [0], [1], [0, 0, 1, 1], [], []>} : vector<8x32xf32>, vector<32x128xf32>, vector<8x128xf32> -> vector<8x128xf32>
    %c0_3 = arith.constant 0 : index
    %c0_4 = arith.constant 0 : index
    %3 = vector.load %arg2[%c0_3, %c0_4] : memref<8x32xf32, #tpu.memory_space<vmem>>, vector<8x32xf32>
    %c0_5 = arith.constant 0 : index
    %c0_6 = arith.constant 0 : index
    %4 = vector.load %arg4[%c0_5, %c0_6] : memref<32x128xf32, #tpu.memory_space<vmem>>, vector<32x128xf32>
    %cst_7 = arith.constant dense<0.000000e+00> : vector<8x128xf32>
    %5 = tpu.matmul %3, %4, %cst_7 {dimension_numbers = #tpu.dot_dimension_numbers<[1], [0], [0], [1], [0, 0, 1, 1], [], []>} : vector<8x32xf32>, vector<32x128xf32>, vector<8x128xf32> -> vector<8x128xf32>
    %6 = arith.addf %2, %5 : vector<8x128xf32>
    %c0_8 = arith.constant 0 : index
    %c0_9 = arith.constant 0 : index
    %7 = vector.load %arg5[%c0_8, %c0_9] : memref<1x128xf32, #tpu.memory_space<vmem>>, vector<1x128xf32>
    %8 = vector.broadcast %7 : vector<1x128xf32> to vector<8x128xf32>
    %9 = arith.addf %6, %8 : vector<8x128xf32>
    %c0_10 = arith.constant 0 : index
    %c0_11 = arith.constant 0 : index
    %10 = vector.load %arg6[%c0_10, %c0_11] : memref<8x128xf32, #tpu.memory_space<vmem>>, vector<8x128xf32>
    tpu.vector_store %arg6[%c0_10, %c0_11], %9 {strides = array<i32>} : memref<8x128xf32, #tpu.memory_space<vmem>>, vector<8x128xf32>,
    return
  }
  func.func @transform_0(%arg0: i32) -> (i32, i32) {
    %c0_i32 = arith.constant 0 : i32
    %c0_i32_0 = arith.constant 0 : i32
    return %arg0, %c0_i32 : i32, i32
  }
  func.func @transform_1(%arg0: i32) -> (i32, i32) {
    %c0_i32 = arith.constant 0 : i32
    %c0_i32_0 = arith.constant 0 : i32
    return %arg0, %c0_i32 : i32, i32
  }
  func.func @transform_2(%arg0: i32) -> (i32, i32) {
    %c0_i32 = arith.constant 0 : i32
    %c0_i32_0 = arith.constant 0 : i32
    %c0_i32_1 = arith.constant 0 : i32
    return %c0_i32, %c0_i32_0 : i32, i32
  }
  func.func @transform_3(%arg0: i32) -> (i32, i32) {
    %c0_i32 = arith.constant 0 : i32
    %c0_i32_0 = arith.constant 0 : i32
    %c0_i32_1 = arith.constant 0 : i32
    return %c0_i32, %c0_i32_0 : i32, i32
  }
  func.func @transform_4(%arg0: i32) -> (i32, i32) {
    %c0_i32 = arith.constant 0 : i32
    %c0_i32_0 = arith.constant 0 : i32
    %c0_i32_1 = arith.constant 0 : i32
    return %c0_i32, %c0_i32_0 : i32, i32
  }
  func.func @transform_5(%arg0: i32) -> (i32, i32) {
    %c0_i32 = arith.constant 0 : i32
    %c0_i32_0 = arith.constant 0 : i32
    return %arg0, %c0_i32 : i32, i32
  }
}

</mosaic_0001>

<llo_original>
// kernel: tpu_custom_call.1
$region0: #{tpu_custom_call.1}
  #allocation0 [shape = 'u32[]', space=smem, size = 0x4, offset = 0x4, fixed_abs, tag = 'smem constant byte address 0x4 - core index']
  #allocation1 [shape = 'u32[144,128]{1,0:T(1,128)}', space=vmem, size = 0x12000, scoped, tag = 'internal scratch']
  %s0 = inlined_call_operand.hbm [shape: f32[16,32], index: 0, kind: input, shape index: {}]
  %s1 = inlined_call_operand.hbm [shape: f32[16,32], index: 1, kind: input, shape index: {}]
  %s2 = inlined_call_operand.hbm [shape: f32[32,128], index: 2, kind: input, shape index: {}]
  %s3 = inlined_call_operand.hbm [shape: f32[32,128], index: 3, kind: input, shape index: {}]
  %s4 = inlined_call_operand.vmem [shape: f32[1,128], index: 4, kind: input, shape index: {}]
  %s5 = inlined_call_operand.hbm [shape: f32[16,128], index: 5, kind: output, shape index: {}]
  %s6 = sld [smem:[#allocation0]]
  $region69: #{tpu_custom_call.1} parent=0
    _
  %s8 = ssub.s32 1, %s6
  %s9 = scalar_select 0, %s8, %s6
  $region1: #{tpu_custom_call.1} parent=0
    #allocation2 [shape = 'u8[8192]{0}', space=vmem, size = 0x2000, scoped, tag = 'input window, operand 0']
    #allocation3 [shape = 's32[2]{0}', space=sflag, size = 0x8, scoped, tag = 'scoped memory for tpu_custom_call.1']
    #allocation4 [shape = 's32[2]{0}', space=sflag, size = 0x8, scoped, tag = 'scoped memory for tpu_custom_call.1']
    #allocation5 [shape = 'u8[8192]{0}', space=vmem, size = 0x2000, scoped, tag = 'input window, operand 1']
    #allocation6 [shape = 's32[2]{0}', space=sflag, size = 0x8, scoped, tag = 'scoped memory for tpu_custom_call.1']
    #allocation7 [shape = 'u8[16384]{0}', space=vmem, size = 0x4000, scoped, tag = 'input window, operand 2, single buffered']
    #allocation8 [shape = 'u8[16384]{0}', space=vmem, size = 0x4000, scoped, tag = 'input window, operand 3, single buffered']
    #allocation9 [shape = 's32[1]{0}', space=sflag, size = 0x4, scoped, tag = 'scoped memory for tpu_custom_call.1']
    #allocation10 [shape = 'u8[8192]{0}', space=vmem, size = 0x2000, scoped, tag = 'output window, operand 0']
    %10 = vsyncpa [#allocation3], 0
    %s11 = scalar_lea.sflag [#allocation3], 1
    %12 = vsyncpa %s11, 0
    %13 = vsyncpa [#allocation6], 0
    %s14 = scalar_lea.sflag [#allocation6], 1
    %15 = vsyncpa %s14, 0
    %16 = vsyncpa [#allocation9], 0
    %17 = vsyncpa [#allocation4], 0
    %s18 = scalar_lea.sflag [#allocation4], 1
    %19 = vsyncpa %s18, 0
    loop: start=0, step=1, limit=4
    $region2: #{tpu_custom_call.1} parent=1 // loop_pre_header
      _
    $region3: #{tpu_custom_call.1} parent=1 // loop_header
      %s21 = sphi 0, %s25
      %p22 = scmp.ge.s32.totalorder %s21, 4
      %s31 = sphi 0, %s33
      %s34 = sphi 0, %s31
      %s35 = sphi 0, %s34
      %s51 = sphi 0, %s35
      %s57 = sphi 0, %s59
      %s60 = sphi 0, %s57
      %s61 = sphi 0, %s60
      %s77 = sphi 0, %s61
      %s81 = sphi 0, %s81
      %s83 = sphi 0, %s81
      %s84 = sphi 0, %s83
      %s98 = sphi 0, %s84
      %s102 = sphi 0, %s102
      %s104 = sphi 0, %s102
      %s105 = sphi 0, %s104
      %s119 = sphi 0, %s105
      %s123 = sphi 0, %s123
      %s125 = sphi 0, %s123
      %s126 = sphi 0, %s125
      %s140 = sphi 0, %s126
      %s146 = sphi 0, %s148
      %s149 = sphi 0, %s146
      %s150 = sphi 0, %s149
      %s166 = sphi 0, %s150
    $region4: #{tpu_custom_call.1} parent=1 // loop_header_branch
      %24 = sbr.rel (%p22) target = $region8
    $region5: #{tpu_custom_call.1} parent=1 // loop_body
      %s26 = ssub.s32 %s21, 1
      %s27 = ssub.s32 %s21, 2
      %s28 = sadd.s32 %s21, 1
      %s29 = ssub.s32 %s21, %s28
      %p30 = scmp.eq.s32.totalorder %s29, 0
      %s32 = sadd.s32 %s31, 1
      %s33 = scalar_select %p30, %s31, %s32
      %p36 = pneg %p30
      %p37 = scmp.eq.s32.totalorder %s21, 1
      %p38 = por %p36, %p37
      %p39 = scmp.ne.s32.totalorder %s31, %s34
      %p40 = scmp.eq.s32.totalorder %s21, 0
      %p41 = por %p39, %p40
      %p42 = scmp.ne.s32.totalorder %s31, %s34
      %p43 = scmp.eq.s32.totalorder %s26, 1
      %p44 = por %p42, %p43
      %p45 = scmp.ne.s32.totalorder %s34, %s35
      %p46 = scmp.eq.s32.totalorder %s26, 0
      %p47 = por %p45, %p46
      %p48 = scmp.ne.s32.totalorder %s34, %s35
      %p49 = scmp.eq.s32.totalorder %s27, 1
      %p50 = por %p48, %p49
      %p52 = scmp.ne.s32.totalorder %s35, %s51
      %p53 = scmp.eq.s32.totalorder %s27, 0
      %p54 = por %p52, %p53
      %s55 = ssub.s32 %s21, %s28
      %p56 = scmp.eq.s32.totalorder %s55, 0
      %s58 = sadd.s32 %s57, 1
      %s59 = scalar_select %p56, %s57, %s58
      %p62 = pneg %p56
      %p63 = scmp.eq.s32.totalorder %s21, 1
      %p64 = por %p62, %p63
      %p65 = scmp.ne.s32.totalorder %s57, %s60
      %p66 = scmp.eq.s32.totalorder %s21, 0
      %p67 = por %p65, %p66
      %p68 = scmp.ne.s32.totalorder %s57, %s60
      %p69 = scmp.eq.s32.totalorder %s26, 1
      %p70 = por %p68, %p69
      %p71 = scmp.ne.s32.totalorder %s60, %s61
      %p72 = scmp.eq.s32.totalorder %s26, 0
      %p73 = por %p71, %p72
      %p74 = scmp.ne.s32.totalorder %s60, %s61
      %p75 = scmp.eq.s32.totalorder %s27, 1
      %p76 = por %p74, %p75
      %p78 = scmp.ne.s32.totalorder %s61, %s77
      %p79 = scmp.eq.s32.totalorder %s27, 0
      %p80 = por %p78, %p79
      %s82 = sadd.s32 %s81, 1
      %p85 = scmp.eq.s32.totalorder %s21, 1
      %p86 = scmp.ne.s32.totalorder %s81, %s83
      %p87 = scmp.eq.s32.totalorder %s21, 0
      %p88 = por %p86, %p87
      %p89 = scmp.ne.s32.totalorder %s81, %s83
      %p90 = scmp.eq.s32.totalorder %s26, 1
      %p91 = por %p89, %p90
      %p92 = scmp.ne.s32.totalorder %s83, %s84
      %p93 = scmp.eq.s32.totalorder %s26, 0
      %p94 = por %p92, %p93
      %p95 = scmp.ne.s32.totalorder %s83, %s84
      %p96 = scmp.eq.s32.totalorder %s27, 1
      %p97 = por %p95, %p96
      %p99 = scmp.ne.s32.totalorder %s84, %s98
      %p100 = scmp.eq.s32.totalorder %s27, 0
      %p101 = por %p99, %p100
      %s103 = sadd.s32 %s102, 1
      %p106 = scmp.eq.s32.totalorder %s21, 1
      %p107 = scmp.ne.s32.totalorder %s102, %s104
      %p108 = scmp.eq.s32.totalorder %s21, 0
      %p109 = por %p107, %p108
      %p110 = scmp.ne.s32.totalorder %s102, %s104
      %p111 = scmp.eq.s32.totalorder %s26, 1
      %p112 = por %p110, %p111
      %p113 = scmp.ne.s32.totalorder %s104, %s105
      %p114 = scmp.eq.s32.totalorder %s26, 0
      %p115 = por %p113, %p114
      %p116 = scmp.ne.s32.totalorder %s104, %s105
      %p117 = scmp.eq.s32.totalorder %s27, 1
      %p118 = por %p116, %p117
      %p120 = scmp.ne.s32.totalorder %s105, %s119
      %p121 = scmp.eq.s32.totalorder %s27, 0
      %p122 = por %p120, %p121
      %s124 = sadd.s32 %s123, 1
      %p127 = scmp.eq.s32.totalorder %s21, 1
      %p128 = scmp.ne.s32.totalorder %s123, %s125
      %p129 = scmp.eq.s32.totalorder %s21, 0
      %p130 = por %p128, %p129
      %p131 = scmp.ne.s32.totalorder %s123, %s125
      %p132 = scmp.eq.s32.totalorder %s26, 1
      %p133 = por %p131, %p132
      %p134 = scmp.ne.s32.totalorder %s125, %s126
      %p135 = scmp.eq.s32.totalorder %s26, 0
      %p136 = por %p134, %p135
      %p137 = scmp.ne.s32.totalorder %s125, %s126
      %p138 = scmp.eq.s32.totalorder %s27, 1
      %p139 = por %p137, %p138
      %p141 = scmp.ne.s32.totalorder %s126, %s140
      %p142 = scmp.eq.s32.totalorder %s27, 0
      %p143 = por %p141, %p142
      %s144 = ssub.s32 %s21, %s28
      %p145 = scmp.eq.s32.totalorder %s144, 0
      %s147 = sadd.s32 %s146, 1
      %s148 = scalar_select %p145, %s146, %s147
      %p151 = pneg %p145
      %p152 = scmp.eq.s32.totalorder %s21, 1
      %p153 = por %p151, %p152
      %p154 = scmp.ne.s32.totalorder %s146, %s149
      %p155 = scmp.eq.s32.totalorder %s21, 0
      %p156 = por %p154, %p155
      %p157 = scmp.ne.s32.totalorder %s146, %s149
      %p158 = scmp.eq.s32.totalorder %s26, 1
      %p159 = por %p157, %p158
      %p160 = scmp.ne.s32.totalorder %s149, %s150
      %p161 = scmp.eq.s32.totalorder %s26, 0
      %p162 = por %p160, %p161
      %p163 = scmp.ne.s32.totalorder %s149, %s150
      %p164 = scmp.eq.s32.totalorder %s27, 1
      %p165 = por %p163, %p164
      %p167 = scmp.ne.s32.totalorder %s150, %s166
      %p168 = scmp.eq.s32.totalorder %s27, 0
      %p169 = por %p167, %p168
      %p170 = scmp.le.s32.totalorder 1, %s21
      %p171 = scmp.lt.s32.totalorder %s21, 3
      %p172 = pnand %p170, %p171
      %p173 = pneg %p172
      // Predicated region
      $region9: #{tpu_custom_call.1} parent=5 // pred_check
        _
      $region10: #{tpu_custom_call.1} parent=5 // pred_check_branch
        %175 = sbr.rel (%p172) target = $region12
      $region11: #{tpu_custom_call.1} parent=5 // pred_region
        %s176 = ssub.s32 %s21, 1
        // Predicated region
        $region13: #{tpu_custom_call.1} parent=11 // pred_check
          %p177 = pneg %p94
        $region14: #{tpu_custom_call.1} parent=11 // pred_check_branch
          %179 = sbr.rel (%p177) target = $region16
        $region15: #{tpu_custom_call.1} parent=11 // pred_region
          %s181 = ssub.s32 512, 512
          %182 = vsyncadd [#allocation6], %s181
          %s183 = sshll.u32 [#allocation7], 4
          %s184 = int_to_ptr.vmem [resolvable:$true] %s183
          %189 = dma.hbm_to_vmem [thread:$0]  %s2, 512, %s184, [#allocation6], 128, 128, 8
        $region16: #{tpu_custom_call.1} parent=11 // pred_fallthru
          _
        // Predicated region
        $region17: #{tpu_custom_call.1} parent=11 // pred_check
          %p190 = pneg %p115
        $region18: #{tpu_custom_call.1} parent=11 // pred_check_branch
          %192 = sbr.rel (%p190) target = $region20
        $region19: #{tpu_custom_call.1} parent=11 // pred_region
          %s194 = ssub.s32 512, 512
          %195 = vsyncadd [#allocation9], %s194
          %s196 = sshll.u32 [#allocation8], 4
          %s197 = int_to_ptr.vmem [resolvable:$true] %s196
          %202 = dma.hbm_to_vmem [thread:$0]  %s3, 512, %s197, [#allocation9], 128, 128, 8
        $region20: #{tpu_custom_call.1} parent=11 // pred_fallthru
          _
        // Predicated region
        $region21: #{tpu_custom_call.1} parent=11 // pred_check
          %p203 = pneg %p136
        $region22: #{tpu_custom_call.1} parent=11 // pred_check_branch
          %205 = sbr.rel (%p203) target = $region24
        $region23: #{tpu_custom_call.1} parent=11 // pred_region
          _
        $region24: #{tpu_custom_call.1} parent=11 // pred_fallthru
          _
      $region12: #{tpu_custom_call.1} parent=5 // pred_fallthru
        _
      %p206 = scmp.lt.s32.totalorder %s21, 2
      // Predicated region
      $region25: #{tpu_custom_call.1} parent=5 // pred_check
        %p207 = pneg %p206
      $region26: #{tpu_custom_call.1} parent=5 // pred_check_branch
        %209 = sbr.rel (%p207) target = $region28
      $region27: #{tpu_custom_call.1} parent=5 // pred_region
        // Predicated region
        $region29: #{tpu_custom_call.1} parent=27 // pred_check
          %p210 = pneg %p41
        $region30: #{tpu_custom_call.1} parent=27 // pred_check_branch
          %212 = sbr.rel (%p210) target = $region32
        $region31: #{tpu_custom_call.1} parent=27 // pred_region
          %s213 = sand.u32 %s31, 1
          %s214 = scalar_lea.sflag [#allocation3], %s213
          %s215 = sand.u32 %s31, 1
          %s216 = smul.addr %s215, 8
          %s217 = scalar_lea.vmem [#allocation2], %s216
          %s219 = ssub.s32 128, 128
          %220 = vsyncadd %s214, %s219
          %s221 = smul.addr %s21, 128
          %s222 = scalar_lea.hbm %s0, %s221
          %s224 = sshll.u32 %s217, 4
          %s225 = int_to_ptr.vmem [resolvable:$true] %s224
          %227 = dma.hbm_to_vmem [thread:$0]  %s222, 128, %s225, %s214
        $region32: #{tpu_custom_call.1} parent=27 // pred_fallthru
          _
        // Predicated region
        $region33: #{tpu_custom_call.1} parent=27 // pred_check
          %p228 = pneg %p67
        $region34: #{tpu_custom_call.1} parent=27 // pred_check_branch
          %230 = sbr.rel (%p228) target = $region36
        $region35: #{tpu_custom_call.1} parent=27 // pred_region
          %s231 = sand.u32 %s21, 1
          %s232 = scalar_lea.sflag [#allocation6], %s231
          %s233 = sand.u32 %s57, 1
          %s234 = smul.addr %s233, 8
          %s235 = scalar_lea.vmem [#allocation5], %s234
          %s237 = ssub.s32 128, 128
          %238 = vsyncadd %s232, %s237
          %s239 = smul.addr %s21, 128
          %s240 = scalar_lea.hbm %s1, %s239
          %s242 = sshll.u32 %s235, 4
          %s243 = int_to_ptr.vmem [resolvable:$true] %s242
          %245 = dma.hbm_to_vmem [thread:$0]  %s240, 128, %s243, %s232
        $region36: #{tpu_custom_call.1} parent=27 // pred_fallthru
          _
      $region28: #{tpu_custom_call.1} parent=5 // pred_fallthru
        _
      %p246 = scmp.le.s32.totalorder 1, %s21
      %p247 = scmp.lt.s32.totalorder %s21, 3
      %p248 = pnand %p246, %p247
      %p249 = pneg %p248
      // Predicated region
      $region37: #{tpu_custom_call.1} parent=5 // pred_check
        _
      $region38: #{tpu_custom_call.1} parent=5 // pred_check_branch
        %251 = sbr.rel (%p248) target = $region40
      $region39: #{tpu_custom_call.1} parent=5 // pred_region
        %s252 = ssub.s32 %s21, 1
        %s253 = sand.u32 %s34, 1
        %s254 = scalar_lea.sflag [#allocation3], %s253
        %s255 = sand.u32 %s34, 1
        %s256 = smul.addr %s255, 8
        %s257 = scalar_lea.vmem [#allocation2], %s256
        // Predicated region
        $region41: #{tpu_custom_call.1} parent=39 // pred_check
          %p258 = pneg %p47
        $region42: #{tpu_custom_call.1} parent=39 // pred_check_branch
          %260 = sbr.rel (%p258) target = $region44
        $region43: #{tpu_custom_call.1} parent=39 // pred_region
          %261 = dma.done %s254, 128
        $region44: #{tpu_custom_call.1} parent=39 // pred_fallthru
          _
        %s262 = sand.u32 %s26, 1
        %s263 = scalar_lea.sflag [#allocation6], %s262
        %s264 = sand.u32 %s60, 1
        %s265 = smul.addr %s264, 8
        %s266 = scalar_lea.vmem [#allocation5], %s265
        // Predicated region
        $region45: #{tpu_custom_call.1} parent=39 // pred_check
          %p267 = pneg %p73
        $region46: #{tpu_custom_call.1} parent=39 // pred_check_branch
          %269 = sbr.rel (%p267) target = $region48
        $region47: #{tpu_custom_call.1} parent=39 // pred_region
          %270 = dma.done %s263, 128
        $region48: #{tpu_custom_call.1} parent=39 // pred_fallthru
          _
        // Predicated region
        $region49: #{tpu_custom_call.1} parent=39 // pred_check
          %p271 = pneg %p94
        $region50: #{tpu_custom_call.1} parent=39 // pred_check_branch
          %273 = sbr.rel (%p271) target = $region52
        $region51: #{tpu_custom_call.1} parent=39 // pred_region
          %274 = dma.done [#allocation6], 512
        $region52: #{tpu_custom_call.1} parent=39 // pred_fallthru
          _
        // Predicated region
        $region53: #{tpu_custom_call.1} parent=39 // pred_check
          %p275 = pneg %p115
        $region54: #{tpu_custom_call.1} parent=39 // pred_check_branch
          %277 = sbr.rel (%p275) target = $region56
        $region55: #{tpu_custom_call.1} parent=39 // pred_region
          %278 = dma.done [#allocation9], 512
        $region56: #{tpu_custom_call.1} parent=39 // pred_fallthru
          _
        %s279 = sand.u32 %s34, 1
        %s280 = scalar_lea.sflag [#allocation3], %s279
        %s281 = sand.u32 %s34, 1
        %s282 = smul.addr %s281, 8
        %s283 = scalar_lea.vmem [#allocation2], %s282
        %p284 = pneg %p47
        %p285 = pneg %p44
        %s286 = sand.u32 %s26, 1
        %s287 = scalar_lea.sflag [#allocation6], %s286
        %s288 = sand.u32 %s60, 1
        %s289 = smul.addr %s288, 8
        %s290 = scalar_lea.vmem [#allocation5], %s289
        %p291 = pneg %p73
        %p292 = pneg %p70
        %p293 = pneg %p94
        %p294 = pneg %p91
        %p295 = pneg %p115
        %p296 = pneg %p112
        %p297 = pneg %p136
        %p298 = pneg %p133
        %p299 = pneg %p162
        %p300 = pneg %p159
        %s301 = sand.u32 %s149, 1
        %s302 = scalar_lea.sflag [#allocation4], %s301
        %s303 = sand.u32 %s149, 1
        %s304 = smul.addr %s303, 8
        %s305 = scalar_lea.vmem [#allocation10], %s304
        %v306 = vld [vmem:[%s257] sm:$0xff]
        %v307 = vld [vmem:[#allocation7] sm:$0xff]
        %v308 = vld [vmem:[#allocation7 + $0x8] sm:$0xff]
        %v309 = vld [vmem:[#allocation7 + $0x10] sm:$0xff]
        %v310 = vld [vmem:[#allocation7 + $0x18] sm:$0xff]
        %v311 = vld [vmem:[%s266] sm:$0xff]
        %v312 = vld [vmem:[#allocation8] sm:$0xff]
        %v313 = vld [vmem:[#allocation8 + $0x8] sm:$0xff]
        %v314 = vld [vmem:[#allocation8 + $0x10] sm:$0xff]
        %v315 = vld [vmem:[#allocation8 + $0x18] sm:$0xff]
        %vm316 = vcmask 261120
        %v318 = vsel %vm316, %v311, 0
        %320 = vmatprep.subr.mxu0 0.0
        %321 = vmatpush1.msra.mxu0 %v312
        %322 = vmatprep.subr.mxu0 0.0
        %323 = vmatpush1.msra.mxu0 %v313
        %324 = vmatprep.subr.mxu0 0.0
        %325 = vmatpush1.msra.mxu0 %v314
        %326 = vmatprep.subr.mxu0 0.0
        %327 = vmatpush1.msra.mxu0 %v315
        %328 = vmatprep.subr.mxu0 0.0
        %329 = vmatpush1.msra.mxu0 0.0
        %330 = vmatprep.subr.mxu0 0.0
        %331 = vmatpush1.msra.mxu0 0.0
        %332 = vmatprep.subr.mxu0 0.0
        %333 = vmatpush1.msra.mxu0 0.0
        %334 = vmatprep.subr.mxu0 0.0
        %335 = vmatpush1.msra.mxu0 0.0
        %336 = vmatprep.subr.mxu0 0.0
        %337 = vmatpush1.msra.mxu0 0.0
        %338 = vmatprep.subr.mxu0 0.0
        %339 = vmatpush1.msra.mxu0 0.0
        %340 = vmatprep.subr.mxu0 0.0
        %341 = vmatpush1.msra.mxu0 0.0
        %342 = vmatprep.subr.mxu0 0.0
        %343 = vmatpush1.msra.mxu0 0.0
        %344 = vmatprep.subr.mxu0 0.0
        %345 = vmatpush1.msra.mxu0 0.0
        %346 = vmatprep.subr.mxu0 0.0
        %347 = vmatpush1.msra.mxu0 0.0
        %348 = vmatprep.subr.mxu0 0.0
        %349 = vmatpush1.msra.mxu0 0.0
        %350 = vmatprep.subr.mxu0 0.0
        %351 = vmatpush1.msra.mxu0 0.0
        %352 = vmatprep.subr.mxu0 0.0
        %353 = vmatpush1.msra.mxu0 0.0
        %354 = vmatprep.subr.mxu0 0.0
        %355 = vmatpush1.msra.mxu0 0.0
        %356 = vmatprep.subr.mxu0 0.0
        %357 = vmatpush1.msra.mxu0 0.0
        %358 = vmatprep.subr.mxu0 0.0
        %359 = vmatpush1.msra.mxu0 0.0
        %360 = vmatprep.subr.mxu0 0.0
        %361 = vmatpush1.msra.mxu0 0.0
        %362 = vmatprep.subr.mxu0 0.0
        %363 = vmatpush1.msra.mxu0 0.0
        %364 = vmatprep.subr.mxu0 0.0
        %365 = vmatpush1.msra.mxu0 0.0
        %366 = vmatprep.subr.mxu0 0.0
        %367 = vmatpush1.msra.mxu0 0.0
        %368 = vmatprep.subr.mxu0 0.0
        %369 = vmatpush1.msra.mxu0 0.0
        %370 = vmatprep.subr.mxu0 0.0
        %371 = vmatpush1.msra.mxu0 0.0
        %372 = vmatprep.subr.mxu0 0.0
        %373 = vmatpush1.msra.mxu0 0.0
        %374 = vmatprep.subr.mxu0 0.0
        %375 = vmatpush1.msra.mxu0 0.0
        %376 = vmatprep.subr.mxu0 0.0
        %377 = vmatpush1.msra.mxu0 0.0
        %378 = vmatprep.subr.mxu0 0.0
        %379 = vmatpush1.msra.mxu0 0.0
        %380 = vmatprep.subr.mxu0 0.0
        %381 = vmatpush1.msra.mxu0 0.0
        %382 = vmatprep.subr.mxu0 0.0
        %383 = vmatpush1.msra.mxu0 0.0
        %384 = vmatprep.mubr.f32.mxu0 0.0
        %385 = vmatmul.mubr.f32.gmra.mrb[0].mxu0 %v318
        %v386 = vpop.f32.mrb[0].mxu0
        %v387 = vadd.f32 0.0, %v386
        %v388 = vpop.f32.mrb[0].mxu0
        %389 = vdwg.mxu0
        %v391 = vsel %vm316, %v306, 0
        %393 = vmatprep.subr.mxu0 0.0
        %394 = vmatpush1.msra.mxu0 %v307
        %395 = vmatprep.subr.mxu0 0.0
        %396 = vmatpush1.msra.mxu0 %v308
        %397 = vmatprep.subr.mxu0 0.0
        %398 = vmatpush1.msra.mxu0 %v309
        %399 = vmatprep.subr.mxu0 0.0
        %400 = vmatpush1.msra.mxu0 %v310
        %401 = vmatprep.subr.mxu0 0.0
        %402 = vmatpush1.msra.mxu0 0.0
        %403 = vmatprep.subr.mxu0 0.0
        %404 = vmatpush1.msra.mxu0 0.0
        %405 = vmatprep.subr.mxu0 0.0
        %406 = vmatpush1.msra.mxu0 0.0
        %407 = vmatprep.subr.mxu0 0.0
        %408 = vmatpush1.msra.mxu0 0.0
        %409 = vmatprep.subr.mxu0 0.0
        %410 = vmatpush1.msra.mxu0 0.0
        %411 = vmatprep.subr.mxu0 0.0
        %412 = vmatpush1.msra.mxu0 0.0
        %413 = vmatprep.subr.mxu0 0.0
        %414 = vmatpush1.msra.mxu0 0.0
        %415 = vmatprep.subr.mxu0 0.0
        %416 = vmatpush1.msra.mxu0 0.0
        %417 = vmatprep.subr.mxu0 0.0
        %418 = vmatpush1.msra.mxu0 0.0
        %419 = vmatprep.subr.mxu0 0.0
        %420 = vmatpush1.msra.mxu0 0.0
        %421 = vmatprep.subr.mxu0 0.0
        %422 = vmatpush1.msra.mxu0 0.0
        %423 = vmatprep.subr.mxu0 0.0
        %424 = vmatpush1.msra.mxu0 0.0
        %425 = vmatprep.subr.mxu0 0.0
        %426 = vmatpush1.msra.mxu0 0.0
        %427 = vmatprep.subr.mxu0 0.0
        %428 = vmatpush1.msra.mxu0 0.0
        %429 = vmatprep.subr.mxu0 0.0
        %430 = vmatpush1.msra.mxu0 0.0
        %431 = vmatprep.subr.mxu0 0.0
        %432 = vmatpush1.msra.mxu0 0.0
        %433 = vmatprep.subr.mxu0 0.0
        %434 = vmatpush1.msra.mxu0 0.0
        %435 = vmatprep.subr.mxu0 0.0
        %436 = vmatpush1.msra.mxu0 0.0
        %437 = vmatprep.subr.mxu0 0.0
        %438 = vmatpush1.msra.mxu0 0.0
        %439 = vmatprep.subr.mxu0 0.0
        %440 = vmatpush1.msra.mxu0 0.0
        %441 = vmatprep.subr.mxu0 0.0
        %442 = vmatpush1.msra.mxu0 0.0
        %443 = vmatprep.subr.mxu0 0.0
        %444 = vmatpush1.msra.mxu0 0.0
        %445 = vmatprep.subr.mxu0 0.0
        %446 = vmatpush1.msra.mxu0 0.0
        %447 = vmatprep.subr.mxu0 0.0
        %448 = vmatpush1.msra.mxu0 0.0
        %449 = vmatprep.subr.mxu0 0.0
        %450 = vmatpush1.msra.mxu0 0.0
        %451 = vmatprep.subr.mxu0 0.0
        %452 = vmatpush1.msra.mxu0 0.0
        %453 = vmatprep.subr.mxu0 0.0
        %454 = vmatpush1.msra.mxu0 0.0
        %455 = vmatprep.subr.mxu0 0.0
        %456 = vmatpush1.msra.mxu0 0.0
        %457 = vmatprep.mubr.f32.mxu0 0.0
        %458 = vmatmul.mubr.f32.gmra.mrb[0].mxu0 %v391
        %v459 = vpop.f32.mrb[0].mxu0
        %v460 = vadd.f32 %v387, %v459
        %v461 = vpop.f32.mrb[0].mxu0
        %462 = vdwg.mxu0
        %v463 = vld [vmem:[%s4] sm:$0x1]
        %v465 = vlaneseq
        %v466 = vshrl.u32 %v465, 7
        %v467 = vsub.s32 0, %v466
        %v468 = vrot.slane %v463, %v467
        %v470 = vadd.f32 %v460, %v468
        %471 = vst [vmem:[%s305] sm:$0xff] %v470
        %s472 = sand.u32 %s149, 1
        %s473 = scalar_lea.sflag [#allocation4], %s472
        %s474 = sand.u32 %s149, 1
        %s475 = smul.addr %s474, 8
        %s476 = scalar_lea.vmem [#allocation10], %s475
        // Predicated region
        $region57: #{tpu_custom_call.1} parent=39 // pred_check
          %p477 = pneg %p159
        $region58: #{tpu_custom_call.1} parent=39 // pred_check_branch
          %479 = sbr.rel (%p477) target = $region60
        $region59: #{tpu_custom_call.1} parent=39 // pred_region
          %s481 = ssub.s32 128, 128
          %482 = vsyncadd %s473, %s481
          %s483 = smul.addr %s26, 128
          %s484 = scalar_lea.hbm %s5, %s483
          %s486 = sshll.u32 %s476, 4
          %s487 = int_to_ptr.vmem [resolvable:$true] %s486
          %489 = dma.vmem_to_hbm [thread:$0]  %s487, 128, %s484, %s473
        $region60: #{tpu_custom_call.1} parent=39 // pred_fallthru
          _
      $region40: #{tpu_custom_call.1} parent=5 // pred_fallthru
        _
      %p490 = scmp.le.s32.totalorder 2, %s21
      // Predicated region
      $region61: #{tpu_custom_call.1} parent=5 // pred_check
        %p491 = pneg %p490
      $region62: #{tpu_custom_call.1} parent=5 // pred_check_branch
        %493 = sbr.rel (%p491) target = $region64
      $region63: #{tpu_custom_call.1} parent=5 // pred_region
        %s494 = ssub.s32 %s21, 2
        // Predicated region
        $region65: #{tpu_custom_call.1} parent=63 // pred_check
          %p495 = pneg %p165
        $region66: #{tpu_custom_call.1} parent=63 // pred_check_branch
          %497 = sbr.rel (%p495) target = $region68
        $region67: #{tpu_custom_call.1} parent=63 // pred_region
          %s498 = sand.u32 %s150, 1
          %s499 = scalar_lea.sflag [#allocation4], %s498
          %s500 = sand.u32 %s150, 1
          %s501 = smul.addr %s500, 8
          %s502 = scalar_lea.vmem [#allocation10], %s501
          %503 = dma.done %s499, 128
        $region68: #{tpu_custom_call.1} parent=63 // pred_fallthru
          _
      $region64: #{tpu_custom_call.1} parent=5 // pred_fallthru
        _
    $region6: #{tpu_custom_call.1} parent=1 // loop_footer
      %s25 = sadd.s32 1, %s21
    $region7: #{tpu_custom_call.1} parent=1 // loop_footer_branch
      %20 = sbr.rel target = $region3
    $region8: #{tpu_custom_call.1} parent=1 // loop_exit
      _
    %504 = vsyncpa [#allocation3], 1
    %s505 = scalar_lea.sflag [#allocation3], 1
    %506 = vsyncpa %s505, 1
    %507 = vsyncpa [#allocation6], 1
    %s508 = scalar_lea.sflag [#allocation6], 1
    %509 = vsyncpa %s508, 1
    %510 = vsyncpa [#allocation9], 1
    %511 = vsyncpa [#allocation4], 1
    %s512 = scalar_lea.sflag [#allocation4], 1
    %513 = vsyncpa %s512, 1

</llo_original>
